<compile_context>
chip_gen: v7x
topology: tpu7x:2x2x1
jax: 0.10.0
libtpu: 0.0.40
codegen_flags: <defaults>
</compile_context>

<pallas_src>
import functools

import jax
import jax.numpy as jnp
from jax.experimental import pallas as pl
from jax.experimental.pallas import tpu as pltpu

F_PAD = 128           # lane-dense width for hidden / action features
ROW_ALIGN = 16        # batch tile alignment (bf16 output sublane tile; also covers f32's 8)
DEF_BLOCK_CAP = 4096  # max batch rows per grid step (~3 MiB of double-buffered VMEM)
MIN_SPLIT = 128       # once b_pad >= this, force grid >= 2 so v7x megacore can shard


def _round_up(n, m):
    return ((n + m - 1) // m) * m


def dqn_kernel(x_ref, w_ref, b_ref, o_ref, *, state_size, hidden):
    """One (block_b, *) batch tile through the whole 3-layer MLP.

    x_ref: (block_b, state_size) f32     w_ref: (3, F_PAD, F_PAD) bf16 (zero-padded)
    b_ref: (3, F_PAD) f32 (zero-padded)  o_ref: (block_b, F_PAD) bf16
    """
    # fc1 + relu: bf16 x bf16 -> f32 MXU accumulate; bias/relu in f32 on the VPU
    # (v5e has no bf16 VPU path).  K is sliced to the real state_size.
    x = x_ref[...].astype(jnp.bfloat16)
    h = jnp.dot(x, w_ref[0, :state_size, :], preferred_element_type=jnp.float32)
    h = jnp.maximum(h + b_ref[0:1, :], 0.0)
    # fc2 + relu.  Lanes hidden..127 of h are exactly zero (zero-padded weights AND
    # biases + ReLU), so slicing K to `hidden` is numerically identical.
    h = jnp.dot(h[:, :hidden].astype(jnp.bfloat16), w_ref[1, :hidden, :],
                preferred_element_type=jnp.float32)
    h = jnp.maximum(h + b_ref[1:2, :], 0.0)
    # fc3 (no activation); single cast to bf16 on the way out halves writeback.
    out = jnp.dot(h[:, :hidden].astype(jnp.bfloat16), w_ref[2, :hidden, :],
                  preferred_element_type=jnp.float32)
    o_ref[...] = (out + b_ref[2:3, :]).astype(jnp.bfloat16)


def pack_params(params, state_size, hidden, action_size):
    """Stack + zero-pad weights/biases into lane-dense (3,128,128)/(3,128) slabs.

    Zero padding of BOTH weights and biases is load-bearing: it is what makes the
    in-kernel K-slicing exact.
    """
    w = jnp.zeros((3, F_PAD, F_PAD), jnp.float32)
    w = w.at[0, :state_size, :hidden].set(params["w1"])
    w = w.at[1, :hidden, :hidden].set(params["w2"])
    w = w.at[2, :hidden, :action_size].set(params["w3"])
    b = jnp.zeros((3, F_PAD), jnp.float32)
    b = b.at[0, :hidden].set(params["b1"][0])
    b = b.at[1, :hidden].set(params["b2"][0])
    b = b.at[2, :action_size].set(params["b3"][0])
    return w.astype(jnp.bfloat16), b  # weights bf16 for the MXU, biases stay f32


def _derive_tiling(batch, block_cap):
    """Pick (b_pad, block_b, grid) with minimal padding slack and megacore-friendly grid."""
    b_pad = _round_up(max(batch, ROW_ALIGN), ROW_ALIGN)
    grid_n = pl.cdiv(b_pad, block_cap)
    if b_pad >= MIN_SPLIT:            # let the "parallel" axis shard across v7x's 2 TCs
        grid_n = max(grid_n, 2)
    block_b = _round_up(pl.cdiv(b_pad, grid_n), ROW_ALIGN)
    b_pad = block_b * grid_n
    return b_pad, block_b, grid_n


def dqn_forward(x, w_stack, b_stack, *, state_size, hidden, action_size,
                block_cap=DEF_BLOCK_CAP):
    """Full MLP forward. x: (B, state_size) f32 -> (B, action_size) f32."""
    B = x.shape[0]
    b_pad, block_b, grid_n = _derive_tiling(B, block_cap)

    # Pad only the batch rows; no lane padding and no dtype cast in the wrapper.
    x_p = jnp.pad(x, ((0, b_pad - B), (0, 0))) if b_pad != B else x

    flops = 2 * b_pad * F_PAD * (state_size + 2 * hidden)
    bytes_accessed = (x_p.size * 4 + w_stack.size * 2 + b_stack.size * 4
                      + b_pad * F_PAD * 2)

    out = pl.pallas_call(
        functools.partial(dqn_kernel, state_size=state_size, hidden=hidden),
        out_shape=jax.ShapeDtypeStruct((b_pad, F_PAD), jnp.bfloat16),
        grid=(grid_n,),
        in_specs=[
            # x: tiled along batch; last dim == full array dim (no 128-lane pad needed).
            pl.BlockSpec((block_b, state_size), lambda i: (i, 0)),
            # weights / biases: constant block index -> DMA'd once, stay resident.
            # (pl.Buffered(1) would drop the unused second ~100 KiB buffer; skipped to
            #  keep the lowering path simple — negligible VMEM either way.)
            pl.BlockSpec((3, F_PAD, F_PAD), lambda i: (0, 0, 0)),
            pl.BlockSpec((3, F_PAD), lambda i: (0, 0)),
        ],
        out_specs=pl.BlockSpec((block_b, F_PAD), lambda i: (i, 0)),
        compiler_params=pltpu.CompilerParams(dimension_semantics=("parallel",)),
        cost_estimate=pl.CostEstimate(flops=flops, transcendentals=0,
                                      bytes_accessed=bytes_accessed),
    )(x_p, w_stack, b_stack)

    # Slice the real rows/actions; tiny cast back to f32 to match nn.Linear output dtype.
    return out[:B, :action_size].astype(jnp.float32)


def init_dqn_params(key, state_size, action_size, hidden=64):
    """Deterministic synthetic init (matches nn.Linear shapes; (in, out) layout)."""
    k1, k2, k3, k4, k5, k6 = jax.random.split(key, 6)

    def lin(kw, kb, fan_in, fan_out):
        bound = 1.0 / jnp.sqrt(jnp.float32(fan_in))
        w = jax.random.uniform(kw, (fan_in, fan_out), jnp.float32, -bound, bound)
        b = jax.random.uniform(kb, (1, fan_out), jnp.float32, -bound, bound)
        return w, b

    w1, b1 = lin(k1, k2, state_size, hidden)
    w2, b2 = lin(k3, k4, hidden, hidden)
    w3, b3 = lin(k5, k6, hidden, action_size)
    return {"w1": w1, "b1": b1, "w2": w2, "b2": b2, "w3": w3, "b3": b3}


def dqn_reference_f32(x, p):
    """Pure f32 reference (PyTorch semantics)."""
    h1 = jnp.maximum(x @ p["w1"] + p["b1"], 0.0)
    h2 = jnp.maximum(h1 @ p["w2"] + p["b2"], 0.0)
    return h2 @ p["w3"] + p["b3"]


def dqn_reference_bf16(x, w_stack, b_stack, state_size, hidden, action_size):
    """Reference mimicking the kernel numerics (bf16 MXU inputs, f32 acc, bf16 out)."""
    xb = x.astype(jnp.bfloat16)
    h = jnp.dot(xb, w_stack[0, :state_size, :], preferred_element_type=jnp.float32)
    h = jnp.maximum(h + b_stack[0:1], 0.0)
    h = jnp.dot(h[:, :hidden].astype(jnp.bfloat16), w_stack[1, :hidden, :],
                preferred_element_type=jnp.float32)
    h = jnp.maximum(h + b_stack[1:2], 0.0)
    out = jnp.dot(h[:, :hidden].astype(jnp.bfloat16), w_stack[2, :hidden, :],
                  preferred_element_type=jnp.float32)
    out = (out + b_stack[2:3]).astype(jnp.bfloat16)
    return out[:, :action_size].astype(jnp.float32)


if __name__ == "__main__":
    key = jax.random.PRNGKey(0)
    k_params, k_x1, k_x2 = jax.random.split(key, 3)

    state_size, action_size, hidden = 16, 4, 64
    params = init_dqn_params(k_params, state_size, action_size, hidden)
    w_stack, b_stack = pack_params(params, state_size, hidden, action_size)

    # Acting-path batch (grid=(1,)).  NOTE: at B~1-8 the call is fixed-cost
    # (weight DMA + launch); the real lever there is batching env steps per call.
    x_small = jax.random.normal(k_x1, (8, state_size), jnp.float32)
    out_small = jax.block_until_ready(
        dqn_forward(x_small, w_stack, b_stack, state_size=state_size,
                    hidden=hidden, action_size=action_size))
    assert out_small.shape == (8, action_size)

    # Replay-style batch: non-tile-aligned size exercising padding + grid=(2,).
    x_big = jax.random.normal(k_x2, (130, state_size), jnp.float32)
    out_big = jax.block_until_ready(
        dqn_forward(x_big, w_stack, b_stack, state_size=state_size,
                    hidden=hidden, action_size=action_size))
    assert out_big.shape == (130, action_size)

    for x, out in ((x_small, out_small), (x_big, out_big)):
        # Tight check against a reference with matching (bf16-MXU) numerics.
        ref_bf16 = dqn_reference_bf16(x, w_stack, b_stack,
                                      state_size, hidden, action_size)
        assert jnp.allclose(out, ref_bf16, atol=1e-2, rtol=1e-2), \
            "mismatch vs bf16 reference"
        # Loose check against the pure-f32 PyTorch-equivalent reference.
        # TODO(synk): bf16 MXU inputs + bf16 output deviate from f32 nn.Linear
        # semantics; validate the error budget if downstream argmax over
        # near-tied Q-values is sensitive.
        ref_f32 = dqn_reference_f32(x, params)
        assert jnp.allclose(out, ref_f32, atol=5e-2, rtol=5e-2), \
            "mismatch vs f32 reference"

    print("KERNEL_OK")
</pallas_src>

<mosaic_0001>
module attributes {stable_mosaic.version = 11 : i64} {
  func.func @dqn_kernel(%arg0: i32, %arg1: memref<16x16xf32, #tpu.memory_space<vmem>>, %arg2: memref<3x128x128xbf16, #tpu.memory_space<vmem>>, %arg3: memref<3x128xf32, #tpu.memory_space<vmem>>, %arg4: memref<16x128xbf16, #tpu.memory_space<vmem>>) attributes {dimension_semantics = [#tpu.dimension_semantics<parallel>], iteration_bounds = array<i64: 1>, scalar_prefetch = 0 : i64, scratch_operands = 0 : i64, tpu.core_type = #tpu.core_type<tc>, window_params = [{transform_indices = @transform_0, window_bounds = array<i64: 16, 16>}, {pipeline_mode = #tpu.pipeline_mode<synchronous>, transform_indices = @transform_1, window_bounds = array<i64: 3, 128, 128>}, {pipeline_mode = #tpu.pipeline_mode<synchronous>, transform_indices = @transform_2, window_bounds = array<i64: 3, 128>}, {transform_indices = @transform_3, window_bounds = array<i64: 16, 128>}]} {
    %c0 = arith.constant 0 : index
    %c0_0 = arith.constant 0 : index
    %0 = vector.load %arg1[%c0, %c0_0] : memref<16x16xf32, #tpu.memory_space<vmem>>, vector<16x16xf32>
    %1 = arith.truncf %0 : vector<16x16xf32> to vector<16x16xbf16>
    %c0_1 = arith.constant 0 : index
    %c0_2 = arith.constant 0 : index
    %c0_3 = arith.constant 0 : index
    %2 = vector.load %arg2[%c0_1, %c0_2, %c0_3] : memref<3x128x128xbf16, #tpu.memory_space<vmem>>, vector<1x16x128xbf16>
    %3 = vector.shape_cast %2 : vector<1x16x128xbf16> to vector<16x128xbf16>
    %cst = arith.constant dense<0.000000e+00> : vector<16x128xf32>
    %4 = tpu.matmul %1, %3, %cst {dimension_numbers = #tpu.dot_dimension_numbers<[1], [0], [0], [1], [0, 0, 1, 1], [], []>} : vector<16x16xbf16>, vector<16x128xbf16>, vector<16x128xf32> -> vector<16x128xf32>
    %c0_4 = arith.constant 0 : index
    %c0_5 = arith.constant 0 : index
    %5 = vector.load %arg3[%c0_4, %c0_5] : memref<3x128xf32, #tpu.memory_space<vmem>>, vector<1x128xf32>
    %6 = vector.broadcast %5 : vector<1x128xf32> to vector<16x128xf32>
    %7 = arith.addf %4, %6 : vector<16x128xf32>
    %cst_6 = arith.constant 0.000000e+00 : f32
    %8 = vector.broadcast %cst_6 : f32 to vector<16x128xf32>
    %9 = arith.maximumf %7, %8 : vector<16x128xf32>
    %10 = vector.extract_strided_slice %9 {offsets = [0, 0], sizes = [16, 64], strides = [1, 1]} : vector<16x128xf32> to vector<16x64xf32>
    %11 = arith.truncf %10 : vector<16x64xf32> to vector<16x64xbf16>
    %c1 = arith.constant 1 : index
    %c0_7 = arith.constant 0 : index
    %c0_8 = arith.constant 0 : index
    %12 = vector.load %arg2[%c1, %c0_7, %c0_8] : memref<3x128x128xbf16, #tpu.memory_space<vmem>>, vector<1x64x128xbf16>
    %13 = vector.shape_cast %12 : vector<1x64x128xbf16> to vector<64x128xbf16>
    %cst_9 = arith.constant dense<0.000000e+00> : vector<16x128xf32>
    %14 = tpu.matmul %11, %13, %cst_9 {dimension_numbers = #tpu.dot_dimension_numbers<[1], [0], [0], [1], [0, 0, 1, 1], [], []>} : vector<16x64xbf16>, vector<64x128xbf16>, vector<16x128xf32> -> vector<16x128xf32>
    %c1_10 = arith.constant 1 : index
    %c0_11 = arith.constant 0 : index
    %15 = vector.load %arg3[%c1_10, %c0_11] : memref<3x128xf32, #tpu.memory_space<vmem>>, vector<1x128xf32>
    %16 = vector.broadcast %15 : vector<1x128xf32> to vector<16x128xf32>
    %17 = arith.addf %14, %16 : vector<16x128xf32>
    %cst_12 = arith.constant 0.000000e+00 : f32
    %18 = vector.broadcast %cst_12 : f32 to vector<16x128xf32>
    %19 = arith.maximumf %17, %18 : vector<16x128xf32>
    %20 = vector.extract_strided_slice %19 {offsets = [0, 0], sizes = [16, 64], strides = [1, 1]} : vector<16x128xf32> to vector<16x64xf32>
    %21 = arith.truncf %20 : vector<16x64xf32> to vector<16x64xbf16>
    %c2 = arith.constant 2 : index
    %c0_13 = arith.constant 0 : index
    %c0_14 = arith.constant 0 : index
    %22 = vector.load %arg2[%c2, %c0_13, %c0_14] : memref<3x128x128xbf16, #tpu.memory_space<vmem>>, vector<1x64x128xbf16>
    %23 = vector.shape_cast %22 : vector<1x64x128xbf16> to vector<64x128xbf16>
    %cst_15 = arith.constant dense<0.000000e+00> : vector<16x128xf32>
    %24 = tpu.matmul %21, %23, %cst_15 {dimension_numbers = #tpu.dot_dimension_numbers<[1], [0], [0], [1], [0, 0, 1, 1], [], []>} : vector<16x64xbf16>, vector<64x128xbf16>, vector<16x128xf32> -> vector<16x128xf32>
    %c2_16 = arith.constant 2 : index
    %c0_17 = arith.constant 0 : index
    %25 = vector.load %arg3[%c2_16, %c0_17] : memref<3x128xf32, #tpu.memory_space<vmem>>, vector<1x128xf32>
    %26 = vector.broadcast %25 : vector<1x128xf32> to vector<16x128xf32>
    %27 = arith.addf %24, %26 : vector<16x128xf32>
    %28 = arith.truncf %27 : vector<16x128xf32> to vector<16x128xbf16>
    %c0_18 = arith.constant 0 : index
    %c0_19 = arith.constant 0 : index
    %29 = vector.load %arg4[%c0_18, %c0_19] : memref<16x128xbf16, #tpu.memory_space<vmem>>, vector<16x128xbf16>
    tpu.vector_store %arg4[%c0_18, %c0_19], %28 {strides = array<i32>} : memref<16x128xbf16, #tpu.memory_space<vmem>>, vector<16x128xbf16>,
    return
  }
  func.func @transform_0(%arg0: i32) -> (i32, i32) {
    %c0_i32 = arith.constant 0 : i32
    %c0_i32_0 = arith.constant 0 : i32
    return %arg0, %c0_i32 : i32, i32
  }
  func.func @transform_1(%arg0: i32) -> (i32, i32, i32) {
    %c0_i32 = arith.constant 0 : i32
    %c0_i32_0 = arith.constant 0 : i32
    %c0_i32_1 = arith.constant 0 : i32
    %c0_i32_2 = arith.constant 0 : i32
    return %c0_i32, %c0_i32_0, %c0_i32_1 : i32, i32, i32
  }
  func.func @transform_2(%arg0: i32) -> (i32, i32) {
    %c0_i32 = arith.constant 0 : i32
    %c0_i32_0 = arith.constant 0 : i32
    %c0_i32_1 = arith.constant 0 : i32
    return %c0_i32, %c0_i32_0 : i32, i32
  }
  func.func @transform_3(%arg0: i32) -> (i32, i32) {
    %c0_i32 = arith.constant 0 : i32
    %c0_i32_0 = arith.constant 0 : i32
    return %arg0, %c0_i32 : i32, i32
  }
}

</mosaic_0001>

<llo_original>
// kernel: tpu_custom_call.1
$region0: #{tpu_custom_call.1}
  #allocation0 [shape = 'u32[]', space=smem, size = 0x4, offset = 0x4, fixed_abs, tag = 'smem constant byte address 0x4 - core index']
  #allocation1 [shape = 'u32[144,128]{1,0:T(1,128)}', space=vmem, size = 0x12000, scoped, tag = 'internal scratch']
  %s0 = inlined_call_operand.hbm [shape: f32[16,16], index: 0, kind: input, shape index: {}]
  %s1 = inlined_call_operand.hbm [shape: bf16[3,128,128], index: 1, kind: input, shape index: {}]
  %s2 = inlined_call_operand.vmem [shape: f32[3,128], index: 2, kind: input, shape index: {}]
  %s3 = inlined_call_operand.hbm [shape: bf16[16,128], index: 3, kind: output, shape index: {}]
  %s4 = sld [smem:[#allocation0]]
  $region30: #{tpu_custom_call.1} parent=0
    _
  %s6 = ssub.s32 1, %s4
  %s7 = scalar_select 0, %s6, %s4
  $region1: #{tpu_custom_call.1} parent=0
    #allocation2 [shape = 'u8[8192]{0}', space=vmem, size = 0x2000, scoped, tag = 'input window, operand 0, single buffered']
    #allocation3 [shape = 's32[1]{0}', space=sflag, size = 0x4, scoped, tag = 'scoped memory for tpu_custom_call.1']
    #allocation4 [shape = 's32[1]{0}', space=sflag, size = 0x4, scoped, tag = 'scoped memory for tpu_custom_call.1']
    #allocation5 [shape = 'u8[98304]{0}', space=vmem, size = 0x18000, scoped, tag = 'input window, operand 1, single buffered']
    #allocation6 [shape = 's32[1]{0}', space=sflag, size = 0x4, scoped, tag = 'scoped memory for tpu_custom_call.1']
    #allocation7 [shape = 'u8[4096]{0}', space=vmem, size = 0x1000, scoped, tag = 'output window, operand 0, single buffered']
    %8 = vsyncpa [#allocation3], 0
    %9 = vsyncpa [#allocation6], 0
    %10 = vsyncpa [#allocation4], 0
    // Predicated region
    $region2: #{tpu_custom_call.1} parent=1 // pred_check
      _
    $region3: #{tpu_custom_call.1} parent=1 // pred_check_branch
      %12 = sbr.rel (0) target = $region5
    $region4: #{tpu_custom_call.1} parent=1 // pred_region
      %s14 = ssub.s32 256, 256
      %15 = vsyncadd [#allocation3], %s14
      %s16 = sshll.u32 [#allocation2], 4
      %s17 = int_to_ptr.vmem [resolvable:$true] %s16
      %22 = dma.hbm_to_vmem [thread:$0]  %s0, 256, %s17, [#allocation3], 128, 128, 8
    $region5: #{tpu_custom_call.1} parent=1 // pred_fallthru
      _
    // Predicated region
    $region6: #{tpu_custom_call.1} parent=1 // pred_check
      _
    $region7: #{tpu_custom_call.1} parent=1 // pred_check_branch
      %24 = sbr.rel (0) target = $region9
    $region8: #{tpu_custom_call.1} parent=1 // pred_region
      %s26 = ssub.s32 3072, 3072
      %27 = vsyncadd [#allocation6], %s26
      %s28 = sshll.u32 [#allocation5], 4
      %s29 = int_to_ptr.vmem [resolvable:$true] %s28
      %34 = dma.hbm_to_vmem [thread:$0]  %s1, 3072, %s29, [#allocation6], 64, 64, 4
    $region9: #{tpu_custom_call.1} parent=1 // pred_fallthru
      _
    // Predicated region
    $region10: #{tpu_custom_call.1} parent=1 // pred_check
      _
    $region11: #{tpu_custom_call.1} parent=1 // pred_check_branch
      %36 = sbr.rel (0) target = $region13
    $region12: #{tpu_custom_call.1} parent=1 // pred_region
      _
    $region13: #{tpu_custom_call.1} parent=1 // pred_fallthru
      _
    // Predicated region
    $region14: #{tpu_custom_call.1} parent=1 // pred_check
      _
    $region15: #{tpu_custom_call.1} parent=1 // pred_check_branch
      %38 = sbr.rel (0) target = $region17
    $region16: #{tpu_custom_call.1} parent=1 // pred_region
      %39 = dma.done [#allocation3], 256
    $region17: #{tpu_custom_call.1} parent=1 // pred_fallthru
      _
    // Predicated region
    $region18: #{tpu_custom_call.1} parent=1 // pred_check
      _
    $region19: #{tpu_custom_call.1} parent=1 // pred_check_branch
      %41 = sbr.rel (0) target = $region21
    $region20: #{tpu_custom_call.1} parent=1 // pred_region
      %42 = dma.done [#allocation6], 3072
    $region21: #{tpu_custom_call.1} parent=1 // pred_fallthru
      _
    %v44 = vld [vmem:[#allocation2] sm:$0xff]
    %v45 = vld [vmem:[#allocation2 + $0x8] sm:$0xff]
    %v46 = vpack.c.bf16 %v45, %v44
    %v47 = vld [vmem:[#allocation5] sm:$0xf]
    %v48 = vld [vmem:[#allocation5 + $0x4] sm:$0xf]
    %v49 = vld [vmem:[%s2] sm:$0x1]
    %v50 = vlaneseq
    %v51 = vshrl.u32 %v50, 7
    %v52 = vsub.s32 0, %v51
    %v53 = vrot.slane %v49, %v52
    %v56 = vunpack.c.l.b16 %v47
    %v57 = vunpack.c.l.b16 %v48
    %v58 = vpack.c.b16 %v57, %v56
    %vm60 = vcmask 130048
    %v62 = vsel %vm60, %v46, 0
    %64 = vmatprep.subr.bf16.mxu0 0
    %65 = vmatpush1.bf16.msra.mxu0 %v58
    %66 = vmatprep.subr.bf16.mxu0 0
    %67 = vmatpush1.bf16.msra.mxu0 0
    %68 = vmatprep.subr.bf16.mxu0 0
    %69 = vmatpush1.bf16.msra.mxu0 0
    %70 = vmatprep.subr.bf16.mxu0 0
    %71 = vmatpush1.bf16.msra.mxu0 0
    %72 = vmatprep.subr.bf16.mxu0 0
    %73 = vmatpush1.bf16.msra.mxu0 0
    %74 = vmatprep.subr.bf16.mxu0 0
    %75 = vmatpush1.bf16.msra.mxu0 0
    %76 = vmatprep.subr.bf16.mxu0 0
    %77 = vmatpush1.bf16.msra.mxu0 0
    %78 = vmatprep.subr.bf16.mxu0 0
    %79 = vmatpush1.bf16.msra.mxu0 0
    %80 = vmatprep.subr.bf16.mxu0 0
    %81 = vmatpush1.bf16.msra.mxu0 0
    %82 = vmatprep.subr.bf16.mxu0 0
    %83 = vmatpush1.bf16.msra.mxu0 0
    %84 = vmatprep.subr.bf16.mxu0 0
    %85 = vmatpush1.bf16.msra.mxu0 0
    %86 = vmatprep.subr.bf16.mxu0 0
    %87 = vmatpush1.bf16.msra.mxu0 0
    %88 = vmatprep.subr.bf16.mxu0 0
    %89 = vmatpush1.bf16.msra.mxu0 0
    %90 = vmatprep.subr.bf16.mxu0 0
    %91 = vmatpush1.bf16.msra.mxu0 0
    %92 = vmatprep.subr.bf16.mxu0 0
    %93 = vmatpush1.bf16.msra.mxu0 0
    %94 = vmatprep.subr.bf16.mxu0 0
    %95 = vmatpush1.bf16.msra.mxu0 0
    %96 = vmatprep.mubr.bf16.mxu0 0
    %97 = vmatmul.mubr.bf16.gmra.mrb[0].mxu0 %v62
    %v98 = vpop.f32.mrb[0].mxu0
    %v99 = vadd.f32 %v53, %v98
    %v100 = vpop.f32.mrb[0].mxu0
    %v101 = vpop.f32.mrb[0].mxu0
    %v102 = vadd.f32 %v53, %v101
    %v103 = vpop.f32.mrb[0].mxu0
    %104 = vdwg.mxu0
    %v105 = vmax.f32 %v99, 0.0
    %v106 = vmax.f32 %v102, 0.0
    %v107 = vpack.c.bf16 %v106, %v105
    %s108 = scalar_lea.vmem [#allocation5], 64
    %v109 = vld [vmem:[%s108] sm:$0xf]
    %v110 = vld [vmem:[%s108 + $0x4] sm:$0xf]
    %v111 = vld [vmem:[%s108 + $0x8] sm:$0xf]
    %v112 = vld [vmem:[%s108 + $0xc] sm:$0xf]
    %v113 = vld [vmem:[%s108 + $0x10] sm:$0xf]
    %v114 = vld [vmem:[%s108 + $0x14] sm:$0xf]
    %v115 = vld [vmem:[%s108 + $0x18] sm:$0xf]
    %v116 = vld [vmem:[%s108 + $0x1c] sm:$0xf]
    %v117 = vld [vmem:[%s2 + $0x1] sm:$0x1]
    %v118 = vlaneseq
    %v119 = vshrl.u32 %v118, 7
    %v120 = vsub.s32 0, %v119
    %v121 = vrot.slane %v117, %v120
    %v130 = vunpack.c.l.b16 %v109
    %v131 = vunpack.c.l.b16 %v110
    %v132 = vunpack.c.l.b16 %v111
    %v133 = vunpack.c.l.b16 %v112
    %v134 = vunpack.c.l.b16 %v113
    %v135 = vunpack.c.l.b16 %v114
    %v136 = vunpack.c.l.b16 %v115
    %v137 = vunpack.c.l.b16 %v116
    %v138 = vpack.c.b16 %v131, %v130
    %v139 = vpack.c.b16 %v133, %v132
    %v140 = vpack.c.b16 %v135, %v134
    %v141 = vpack.c.b16 %v137, %v136
    %vm146 = vcmask 523264
    %v148 = vsel %vm146, %v107, 0
    %150 = vmatprep.subr.bf16.mxu0 0
    %151 = vmatpush1.bf16.msra.mxu0 %v138
    %152 = vmatprep.subr.bf16.mxu0 0
    %153 = vmatpush1.bf16.msra.mxu0 %v139
    %154 = vmatprep.subr.bf16.mxu0 0
    %155 = vmatpush1.bf16.msra.mxu0 %v140
    %156 = vmatprep.subr.bf16.mxu0 0
    %157 = vmatpush1.bf16.msra.mxu0 %v141
    %158 = vmatprep.subr.bf16.mxu0 0
    %159 = vmatpush1.bf16.msra.mxu0 0
    %160 = vmatprep.subr.bf16.mxu0 0
    %161 = vmatpush1.bf16.msra.mxu0 0
    %162 = vmatprep.subr.bf16.mxu0 0
    %163 = vmatpush1.bf16.msra.mxu0 0
    %164 = vmatprep.subr.bf16.mxu0 0
    %165 = vmatpush1.bf16.msra.mxu0 0
    %166 = vmatprep.subr.bf16.mxu0 0
    %167 = vmatpush1.bf16.msra.mxu0 0
    %168 = vmatprep.subr.bf16.mxu0 0
    %169 = vmatpush1.bf16.msra.mxu0 0
    %170 = vmatprep.subr.bf16.mxu0 0
    %171 = vmatpush1.bf16.msra.mxu0 0
    %172 = vmatprep.subr.bf16.mxu0 0
    %173 = vmatpush1.bf16.msra.mxu0 0
    %174 = vmatprep.subr.bf16.mxu0 0
    %175 = vmatpush1.bf16.msra.mxu0 0
    %176 = vmatprep.subr.bf16.mxu0 0
    %177 = vmatpush1.bf16.msra.mxu0 0
    %178 = vmatprep.subr.bf16.mxu0 0
    %179 = vmatpush1.bf16.msra.mxu0 0
    %180 = vmatprep.subr.bf16.mxu0 0
    %181 = vmatpush1.bf16.msra.mxu0 0
    %182 = vmatprep.mubr.bf16.mxu0 0
    %183 = vmatmul.mubr.bf16.gmra.mrb[0].mxu0 %v148
    %v184 = vpop.f32.mrb[0].mxu0
    %v185 = vadd.f32 %v121, %v184
    %v186 = vpop.f32.mrb[0].mxu0
    %v187 = vpop.f32.mrb[0].mxu0
    %v188 = vadd.f32 %v121, %v187
    %v189 = vpop.f32.mrb[0].mxu0
    %190 = vdwg.mxu0
    %v191 = vmax.f32 %v185, 0.0
    %v192 = vmax.f32 %v188, 0.0
    %v193 = vpack.c.bf16 %v192, %v191
    %s194 = scalar_lea.vmem [#allocation5], 128
    %v195 = vld [vmem:[%s194] sm:$0xf]
    %v196 = vld [vmem:[%s194 + $0x4] sm:$0xf]
    %v197 = vld [vmem:[%s194 + $0x8] sm:$0xf]
    %v198 = vld [vmem:[%s194 + $0xc] sm:$0xf]
    %v199 = vld [vmem:[%s194 + $0x10] sm:$0xf]
    %v200 = vld [vmem:[%s194 + $0x14] sm:$0xf]
    %v201 = vld [vmem:[%s194 + $0x18] sm:$0xf]
    %v202 = vld [vmem:[%s194 + $0x1c] sm:$0xf]
    %v203 = vld [vmem:[%s2 + $0x2] sm:$0x1]
    %v204 = vlaneseq
    %v205 = vshrl.u32 %v204, 7
    %v206 = vsub.s32 0, %v205
    %v207 = vrot.slane %v203, %v206
    %v216 = vunpack.c.l.b16 %v195
    %v217 = vunpack.c.l.b16 %v196
    %v218 = vunpack.c.l.b16 %v197
    %v219 = vunpack.c.l.b16 %v198
    %v220 = vunpack.c.l.b16 %v199
    %v221 = vunpack.c.l.b16 %v200
    %v222 = vunpack.c.l.b16 %v201
    %v223 = vunpack.c.l.b16 %v202
    %v224 = vpack.c.b16 %v217, %v216
    %v225 = vpack.c.b16 %v219, %v218
    %v226 = vpack.c.b16 %v221, %v220
    %v227 = vpack.c.b16 %v223, %v222
    %v233 = vsel %vm146, %v193, 0
    %235 = vmatprep.subr.bf16.mxu0 0
    %236 = vmatpush1.bf16.msra.mxu0 %v224
    %237 = vmatprep.subr.bf16.mxu0 0
    %238 = vmatpush1.bf16.msra.mxu0 %v225
    %239 = vmatprep.subr.bf16.mxu0 0
    %240 = vmatpush1.bf16.msra.mxu0 %v226
    %241 = vmatprep.subr.bf16.mxu0 0
    %242 = vmatpush1.bf16.msra.mxu0 %v227
    %243 = vmatprep.subr.bf16.mxu0 0
    %244 = vmatpush1.bf16.msra.mxu0 0
    %245 = vmatprep.subr.bf16.mxu0 0
    %246 = vmatpush1.bf16.msra.mxu0 0
    %247 = vmatprep.subr.bf16.mxu0 0
    %248 = vmatpush1.bf16.msra.mxu0 0
    %249 = vmatprep.subr.bf16.mxu0 0
    %250 = vmatpush1.bf16.msra.mxu0 0
    %251 = vmatprep.subr.bf16.mxu0 0
    %252 = vmatpush1.bf16.msra.mxu0 0
    %253 = vmatprep.subr.bf16.mxu0 0
    %254 = vmatpush1.bf16.msra.mxu0 0
    %255 = vmatprep.subr.bf16.mxu0 0
    %256 = vmatpush1.bf16.msra.mxu0 0
    %257 = vmatprep.subr.bf16.mxu0 0
    %258 = vmatpush1.bf16.msra.mxu0 0
    %259 = vmatprep.subr.bf16.mxu0 0
    %260 = vmatpush1.bf16.msra.mxu0 0
    %261 = vmatprep.subr.bf16.mxu0 0
    %262 = vmatpush1.bf16.msra.mxu0 0
    %263 = vmatprep.subr.bf16.mxu0 0
    %264 = vmatpush1.bf16.msra.mxu0 0
    %265 = vmatprep.subr.bf16.mxu0 0
    %266 = vmatpush1.bf16.msra.mxu0 0
    %267 = vmatprep.mubr.bf16.mxu0 0
    %268 = vmatmul.mubr.bf16.gmra.mrb[0].mxu0 %v233
    %v269 = vpop.f32.mrb[0].mxu0
    %v270 = vadd.f32 %v207, %v269
    %v271 = vpop.f32.mrb[0].mxu0
    %v272 = vpop.f32.mrb[0].mxu0
    %v273 = vadd.f32 %v207, %v272
    %v274 = vpop.f32.mrb[0].mxu0
    %275 = vdwg.mxu0
    %v276 = vpack.c.bf16 %v273, %v270
    %v278 = vunpack.c.l.b16 %v276
    %v279 = vunpack.c.h.b16 %v276
    %v280 = vpack.c.b16 %v278, %v278
    %v281 = vpack.c.b16 %v279, %v279
    %284 = vst [vmem:[#allocation7] sm:$0xf] %v280
    %285 = vst [vmem:[#allocation7 + $0x4] sm:$0xf] %v281
    // Predicated region
    $region22: #{tpu_custom_call.1} parent=1 // pred_check
      _
    $region23: #{tpu_custom_call.1} parent=1 // pred_check_branch
      %287 = sbr.rel (0) target = $region25
    $region24: #{tpu_custom_call.1} parent=1 // pred_region
      %s289 = ssub.s32 128, 128
      %290 = vsyncadd [#allocation4], %s289
      %s291 = sshll.u32 [#allocation7], 4
      %s292 = int_to_ptr.vmem [resolvable:$true] %s291
      %297 = dma.vmem_to_hbm [thread:$0]  %s292, 128, %s3, [#allocation4], 64, 64, 4
    $region25: #{tpu_custom_call.1} parent=1 // pred_fallthru
      _
    // Predicated region
    $region26: #{tpu_custom_call.1} parent=1 // pred_check
      _
    $region27: #{tpu_custom_call.1} parent=1 // pred_check_branch
      %299 = sbr.rel (0) target = $region29
    $region28: #{tpu_custom_call.1} parent=1 // pred_region
      %300 = dma.done [#allocation4], 128
    $region29: #{tpu_custom_call.1} parent=1 // pred_fallthru
      _
    %301 = vsyncpa [#allocation3], 1
    %302 = vsyncpa [#allocation6], 1
    %303 = vsyncpa [#allocation4], 1

</llo_original>
